<compile_context>
chip_gen: v5e
topology: v5e:2x2
jax: 0.10.0
libtpu: 0.0.40
codegen_flags: <defaults>
</compile_context>

<pallas_src>
import jax
import jax.numpy as jnp
from jax.experimental import pallas as pl
from jax.experimental.pallas import tpu as pltpu

CLS_ID = 101   # BERT [CLS]
SEP_ID = 102   # BERT [SEP]
PAD_ID = 0     # BERT [PAD]

_MIN_TB = 32          # int8 attention_mask native tiling is (32, 128)
_MIN_GRID_STEPS = 4   # v7x: 2 TCs x >=2 steps each; also enables DMA pipelining


def _round_up(x, m):
    return ((x + m - 1) // m) * m


def _pick_tb(B, S):
    """Batch-tile rows: ~1 MiB of int32 per block stream (HBM-roofline sweet
    spot), capped at 2048 rows, but small enough that non-trivial batches get
    >= _MIN_GRID_STEPS grid steps (v7x dual-TC + in/out DMA overlap)."""
    target = (1 << 20) // (4 * S)                              # rows for ~1 MiB int32
    tb = max(_MIN_TB, min(2048, (target // _MIN_TB) * _MIN_TB))
    if B >= _MIN_GRID_STEPS * _MIN_TB:
        tb = min(tb, max(_MIN_TB, _round_up(pl.cdiv(B, _MIN_GRID_STEPS), _MIN_TB)))
    if tb >= B:
        return B          # block == full batch dim: always layout-legal
    return tb             # multiple of 32 -> int8 (32,128) tiling safe


def _tokenize_kernel(ids_ref, len_ref, out_ids_ref, mask_ref):
    """ids_ref: [TB, S] int32 raw token ids (vocab-looked-up; tail / OOB
                columns may be garbage -- they are masked below)
       len_ref: [TB, 1] int32 true sentence lengths
       outputs: input_ids [TB, S] int32, attention_mask [TB, S] int8."""
    ids = ids_ref[...]                                    # [TB, S]
    lens = len_ref[...]                                   # [TB, 1]
    TB, S = ids.shape

    # truncation=True, max_length=S, add_special_tokens=True
    #   -> keep at most S-2 raw tokens, then [CLS] ... [SEP] [PAD]*
    trunc = jnp.minimum(lens, S - 2)                      # [TB, 1]
    sep_col = trunc + 1                                   # column of [SEP]

    col = jax.lax.broadcasted_iota(jnp.int32, (TB, S), 1)

    # Shift raw tokens right by one so position j holds raw[j-1] (room for
    # [CLS]); the wrap of the last column into column 0 is overwritten by the
    # CLS write below (keep this write order). Any undefined tail columns
    # (when the raw buffer is shorter than S) land past sep_col and are
    # overwritten with SEP/PAD, so they are never consumed.
    shifted = pltpu.roll(ids, shift=1, axis=1)            # XLU rotate, cheap

    keep = col <= sep_col                                 # [CLS] .. [SEP] span
    out = jnp.where(col == 0, jnp.int32(CLS_ID), shifted)
    out = jnp.where(col == sep_col, jnp.int32(SEP_ID), out)
    out = jnp.where(keep, out, jnp.int32(PAD_ID))

    out_ids_ref[...] = out
    mask_ref[...] = keep.astype(jnp.int8)                 # attention_mask


def tokenize(raw_ids, lengths, max_length=128, *, donate_raw_ids=False):
    """raw_ids: [B, L] int32 raw token ids, lengths: [B] int.

    Returns an HF-style dict with statically padded [B, max_length] tensors.
    token_type_ids is returned as a broadcastable (1, max_length) zero row
    (mode='sig' => identically zero) instead of a materialized [B, S] array.
    """
    B, L = raw_ids.shape
    S = int(max_length)
    assert S % 128 == 0, "max_length must be lane-aligned (multiple of 128)"
    if raw_ids.dtype != jnp.int32:
        raise TypeError(
            f"raw_ids must be int32, got {raw_ids.dtype}: an implicit cast adds "
            "a full read+write pass over the dominant input stream and defeats "
            "donate_raw_ids HBM-page aliasing")

    lens2d = lengths.reshape(B, 1).astype(jnp.int32)

    TB = _pick_tb(B, S)
    grid = (pl.cdiv(B, TB),)

    aliases = {}
    if donate_raw_ids and L == S:
        # Reuse the raw-ids HBM pages for input_ids (caller must donate the
        # buffer at the jit boundary and must not need raw_ids afterwards).
        aliases = {0: 0}

    # Double-buffered VMEM footprint: ids-in (int32) + ids-out (int32)
    # + mask-out (int8) + lens. Only raise the scoped-VMEM limit above the
    # conservative default (v5e: 16 MiB) when actually needed.
    vmem_need = 2 * (TB * S * 4 + TB * S * 4 + TB * S * 1 + TB * 4)
    vmem_limit = None
    if vmem_need > (12 << 20):
        vmem_limit = min(int(vmem_need) + (2 << 20), 32 << 20)

    out_ids, attn_mask = pl.pallas_call(
        _tokenize_kernel,
        out_shape=(
            jax.ShapeDtypeStruct((B, S), jnp.int32),   # input_ids
            jax.ShapeDtypeStruct((B, S), jnp.int8),    # attention_mask
        ),
        grid=grid,
        in_specs=[
            # Always a (TB, S) block: reads cols 0..S-1 when L >= S; when
            # L < S the partial block's tail is undefined on read but never
            # consumed (masked in-kernel) -- no wrapper-side pad copy.
            pl.BlockSpec((TB, S), lambda i: (i, 0)),
            pl.BlockSpec((TB, 1), lambda i: (i, 0)),
        ],
        out_specs=(
            pl.BlockSpec((TB, S), lambda i: (i, 0)),
            pl.BlockSpec((TB, S), lambda i: (i, 0)),
        ),
        input_output_aliases=aliases,
        compiler_params=pltpu.CompilerParams(
            dimension_semantics=("parallel",),         # v7x: shard batch on 2 TCs
            vmem_limit_bytes=vmem_limit),
    )(raw_ids, lens2d)

    # token_type_ids is identically zero (mode='sig'); return a broadcastable
    # row so no [B, S] int32 zeros array is ever written to HBM.
    token_type = jnp.zeros((1, S), jnp.int32)

    return {
        "input_ids": out_ids,
        "token_type_ids": token_type,      # broadcastable (1, S) zeros
        "attention_mask": attn_mask,       # int8; cast downstream only if needed
    }


def _reference(raw_ids, lengths, max_length):
    """Pure-jnp reference for correctness check."""
    B, L = raw_ids.shape
    S = max_length
    trunc = jnp.minimum(lengths, S - 2).reshape(B, 1)
    col = jnp.arange(S, dtype=jnp.int32)[None, :]
    raw = jnp.pad(raw_ids, ((0, 0), (0, max(S - L, 0))))[:, :S]
    shifted = jnp.concatenate([raw[:, -1:], raw[:, :-1]], axis=1)
    out = jnp.where(col == 0, CLS_ID, shifted)
    out = jnp.where(col == trunc + 1, SEP_ID, out)
    out = jnp.where(col > trunc + 1, PAD_ID, out)
    mask = (col < trunc + 2).astype(jnp.int32)
    tt = jnp.zeros((B, S), jnp.int32)
    return out, tt, mask


if __name__ == "__main__":
    key = jax.random.PRNGKey(0)
    k1, k2, k3, k4 = jax.random.split(key, 4)

    MAX_LEN = 128    # stand-in for max_length=256 (lane-aligned, small)

    # Case 1: raw buffer longer than max_length (truncation path, L >= S).
    B, L_RAW = 8, 160
    raw_ids = jax.random.randint(k1, (B, L_RAW), 1000, 30000, dtype=jnp.int32)
    lengths = jax.random.randint(k2, (B,), 3, L_RAW + 1, dtype=jnp.int32)

    enc = tokenize(raw_ids, lengths, max_length=MAX_LEN)
    jax.block_until_ready(enc)

    ref_ids, ref_tt, ref_mask = _reference(raw_ids, lengths, MAX_LEN)
    assert jnp.array_equal(enc["input_ids"], ref_ids)
    assert jnp.array_equal(
        jnp.broadcast_to(enc["token_type_ids"], (B, MAX_LEN)), ref_tt)
    assert jnp.array_equal(enc["attention_mask"].astype(jnp.int32), ref_mask)
    assert bool(jnp.all(enc["input_ids"][:, 0] == CLS_ID))

    # Case 2: raw buffer shorter than max_length (L < S). No wrapper pad:
    # the kernel reads a partial input block and masks the undefined tail.
    B2, L2 = 8, 96
    raw2 = jax.random.randint(k3, (B2, L2), 1000, 30000, dtype=jnp.int32)
    len2 = jax.random.randint(k4, (B2,), 1, L2 + 1, dtype=jnp.int32)

    enc2 = tokenize(raw2, len2, max_length=MAX_LEN)
    jax.block_until_ready(enc2)

    r2_ids, _, r2_mask = _reference(raw2, len2, MAX_LEN)
    assert jnp.array_equal(enc2["input_ids"], r2_ids)
    assert jnp.array_equal(enc2["attention_mask"].astype(jnp.int32), r2_mask)
    assert bool(jnp.all(enc2["input_ids"][:, 0] == CLS_ID))

    print("KERNEL_OK")
</pallas_src>

<mosaic_0001>
module attributes {stable_mosaic.version = 11 : i64} {
  func.func @_tokenize_kernel(%arg0: i32, %arg1: memref<8x128xi32, #tpu.memory_space<vmem>>, %arg2: memref<8x1xi32, #tpu.memory_space<vmem>>, %arg3: memref<8x128xi32, #tpu.memory_space<vmem>>, %arg4: memref<8x128xi8, #tpu.memory_space<vmem>>) attributes {dimension_semantics = [#tpu.dimension_semantics<parallel>], iteration_bounds = array<i64: 1>, scalar_prefetch = 0 : i64, scratch_operands = 0 : i64, tpu.core_type = #tpu.core_type<tc>, window_params = [{transform_indices = @transform_0, window_bounds = array<i64: 8, 128>}, {transform_indices = @transform_1, window_bounds = array<i64: 8, 1>}, {transform_indices = @transform_2, window_bounds = array<i64: 8, 128>}, {transform_indices = @transform_3, window_bounds = array<i64: 8, 128>}]} {
    %c0 = arith.constant 0 : index
    %c0_0 = arith.constant 0 : index
    %0 = vector.load %arg1[%c0, %c0_0] : memref<8x128xi32, #tpu.memory_space<vmem>>, vector<8x128xi32>
    %c0_1 = arith.constant 0 : index
    %c0_2 = arith.constant 0 : index
    %1 = vector.load %arg2[%c0_1, %c0_2] : memref<8x1xi32, #tpu.memory_space<vmem>>, vector<8x1xi32>
    %c126_i32 = arith.constant 126 : i32
    %2 = vector.broadcast %c126_i32 : i32 to vector<8x1xi32>
    %3 = arith.minsi %1, %2 : vector<8x1xi32>
    %c1_i32 = arith.constant 1 : i32
    %4 = vector.broadcast %c1_i32 : i32 to vector<8x1xi32>
    %5 = arith.addi %3, %4 : vector<8x1xi32>
    %6 = tpu.iota {dimensions = array<i32: 1>} : vector<8x128xi32>
    %c1_i32_3 = arith.constant 1 : i32
    %7 = tpu.dynamic_rotate %0 by %c1_i32_3 dim 1 : vector<8x128xi32>, i32 -> vector<8x128xi32>
    %8 = vector.broadcast %5 : vector<8x1xi32> to vector<8x128xi32>
    %9 = arith.cmpi sle, %6, %8 : vector<8x128xi32>
    %c0_i32 = arith.constant 0 : i32
    %10 = vector.broadcast %c0_i32 : i32 to vector<8x128xi32>
    %11 = arith.cmpi eq, %6, %10 : vector<8x128xi32>
    %c101_i32 = arith.constant 101 : i32
    %12 = vector.broadcast %c101_i32 : i32 to vector<8x128xi32>
    %13 = arith.select %11, %12, %7 : vector<8x128xi1>, vector<8x128xi32>
    %14 = vector.broadcast %5 : vector<8x1xi32> to vector<8x128xi32>
    %15 = arith.cmpi eq, %6, %14 : vector<8x128xi32>
    %c102_i32 = arith.constant 102 : i32
    %16 = vector.broadcast %c102_i32 : i32 to vector<8x128xi32>
    %17 = arith.select %15, %16, %13 : vector<8x128xi1>, vector<8x128xi32>
    %c0_i32_4 = arith.constant 0 : i32
    %18 = vector.broadcast %c0_i32_4 : i32 to vector<8x128xi32>
    %19 = arith.select %9, %17, %18 : vector<8x128xi1>, vector<8x128xi32>
    %c0_5 = arith.constant 0 : index
    %c0_6 = arith.constant 0 : index
    %20 = vector.load %arg3[%c0_5, %c0_6] : memref<8x128xi32, #tpu.memory_space<vmem>>, vector<8x128xi32>
    tpu.vector_store %arg3[%c0_5, %c0_6], %19 {strides = array<i32>} : memref<8x128xi32, #tpu.memory_space<vmem>>, vector<8x128xi32>,
    %21 = arith.extui %9 : vector<8x128xi1> to vector<8x128xi8>
    %c0_7 = arith.constant 0 : index
    %c0_8 = arith.constant 0 : index
    %22 = vector.load %arg4[%c0_7, %c0_8] : memref<8x128xi8, #tpu.memory_space<vmem>>, vector<8x128xi8>
    tpu.vector_store %arg4[%c0_7, %c0_8], %21 {strides = array<i32>} : memref<8x128xi8, #tpu.memory_space<vmem>>, vector<8x128xi8>,
    return
  }
  func.func @transform_0(%arg0: i32) -> (i32, i32) {
    %c0_i32 = arith.constant 0 : i32
    %c0_i32_0 = arith.constant 0 : i32
    return %arg0, %c0_i32 : i32, i32
  }
  func.func @transform_1(%arg0: i32) -> (i32, i32) {
    %c0_i32 = arith.constant 0 : i32
    %c0_i32_0 = arith.constant 0 : i32
    return %arg0, %c0_i32 : i32, i32
  }
  func.func @transform_2(%arg0: i32) -> (i32, i32) {
    %c0_i32 = arith.constant 0 : i32
    %c0_i32_0 = arith.constant 0 : i32
    return %arg0, %c0_i32 : i32, i32
  }
  func.func @transform_3(%arg0: i32) -> (i32, i32) {
    %c0_i32 = arith.constant 0 : i32
    %c0_i32_0 = arith.constant 0 : i32
    return %arg0, %c0_i32 : i32, i32
  }
}

</mosaic_0001>

<llo_original>
// kernel: tpu_custom_call.1
$region0: #{tpu_custom_call.1}
  #allocation0 [shape = 'u32[]', space=smem, size = 0x4, offset = 0x4, fixed_abs, tag = 'smem constant byte address 0x4 - core index']
  #allocation1 [shape = 'u32[72,128]{1,0:T(1,128)}', space=vmem, size = 0x9000, scoped, tag = 'internal scratch']
  %s0 = inlined_call_operand.hbm [shape: s32[8,160], index: 0, kind: input, shape index: {}]
  %s1 = inlined_call_operand.vmem [shape: s32[8,1], index: 1, kind: input, shape index: {}]
  %s2 = inlined_call_operand.hbm [shape: s32[8,128], index: 2, kind: output, shape index: {0}]
  %s3 = inlined_call_operand.hbm [shape: s8[8,128], index: 3, kind: output, shape index: {1}]
  %4 = xla_tuple %s2, %s3
  %s5 = sld [smem:[#allocation0]]
  $region30: #{tpu_custom_call.1} parent=0
    _
  %s7 = ssub.s32 1, %s5
  %s8 = scalar_select 0, %s7, %s5
  $region1: #{tpu_custom_call.1} parent=0
    #allocation2 [shape = 'u8[4096]{0}', space=vmem, size = 0x1000, scoped, tag = 'input window, operand 0, single buffered']
    #allocation3 [shape = 's32[1]{0}', space=sflag, size = 0x4, scoped, tag = 'scoped memory for tpu_custom_call.1']
    #allocation4 [shape = 's32[1]{0}', space=sflag, size = 0x4, scoped, tag = 'scoped memory for tpu_custom_call.1']
    #allocation5 [shape = 'u8[4096]{0}', space=vmem, size = 0x1000, scoped, tag = 'output window, operand 0, single buffered']
    #allocation6 [shape = 'u8[1024]{0}', space=vmem, size = 0x400, scoped, tag = 'output window, operand 1, single buffered']
    #allocation7 [shape = 's32[1]{0}', space=sflag, size = 0x4, scoped, tag = 'scoped memory for tpu_custom_call.1']
    %9 = vsyncpa [#allocation3], 0
    %10 = vsyncpa [#allocation4], 0
    %11 = vsyncpa [#allocation7], 0
    // Predicated region
    $region2: #{tpu_custom_call.1} parent=1 // pred_check
      _
    $region3: #{tpu_custom_call.1} parent=1 // pred_check_branch
      %13 = sbr.rel (0) target = $region5
    $region4: #{tpu_custom_call.1} parent=1 // pred_region
      %15 = vsyncadd [#allocation3], 0
      %s17 = sshll.u32 %s0, 4
      %s18 = int_to_ptr.hbm [resolvable:$true] %s17
      %s19 = sshll.u32 [#allocation2], 4
      %s20 = int_to_ptr.vmem [resolvable:$true] %s19
      %22 = dma.hbm_to_vmem [thread:$0]  %s18, 128, %s20, [#allocation3]
    $region5: #{tpu_custom_call.1} parent=1 // pred_fallthru
      _
    // Predicated region
    $region6: #{tpu_custom_call.1} parent=1 // pred_check
      _
    $region7: #{tpu_custom_call.1} parent=1 // pred_check_branch
      %24 = sbr.rel (0) target = $region9
    $region8: #{tpu_custom_call.1} parent=1 // pred_region
      _
    $region9: #{tpu_custom_call.1} parent=1 // pred_fallthru
      _
    // Predicated region
    $region10: #{tpu_custom_call.1} parent=1 // pred_check
      _
    $region11: #{tpu_custom_call.1} parent=1 // pred_check_branch
      %26 = sbr.rel (0) target = $region13
    $region12: #{tpu_custom_call.1} parent=1 // pred_region
      %28 = dma.done [#allocation3], 128
    $region13: #{tpu_custom_call.1} parent=1 // pred_fallthru
      _
    %v31 = vld [vmem:[#allocation2] sm:$0xff]
    %v32 = vld [vmem:[%s1] sm:$0xff]
    %vm33 = vcmp.lt.s32.totalorder %v32, 126
    %v34 = vsel %vm33, %v32, 126
    %v35 = vadd.s32 %v34, 1
    %v36 = vlaneseq
    %v37 = vand.u32 %v36, 127
    %38 = vrot.lane.b32.xlu0 %v31, 1
    %v39 = vpop.permute.xlu0 %38
    %40 = vset.pattern.permute.xlu0 0
    %41 = vperm.xlu0 %40, %v35
    %v42 = vpop.permute.xlu0 %41
    %vm43 = vcmp.le.s32.totalorder %v37, %v42
    %vm44 = vcmp.eq.s32.totalorder %v37, 0
    %v45 = vsel %vm44, 101, %v39
    %vm46 = vcmp.eq.s32.totalorder %v37, %v42
    %v47 = vsel %vm46, 102, %v45
    %v48 = vsel %vm43, %v47, 0
    %49 = vst [vmem:[#allocation5] sm:$0xff] %v48
    %vm50 = vmpackc.low %vm43, %vm43
    %v51 = vsel %vm50, 16711935, 0
    %v52 = vsel %vm50, 16711935, 0
    %v53 = vpack.c.b8 %v52, %v51
    %vm54 = vnez %v53
    %v55 = vsel %vm54, 16843009, 0
    %56 = vst [vmem:[#allocation6] sm:$0x3] %v55
    // Predicated region
    $region14: #{tpu_custom_call.1} parent=1 // pred_check
      _
    $region15: #{tpu_custom_call.1} parent=1 // pred_check_branch
      %58 = sbr.rel (0) target = $region17
    $region16: #{tpu_custom_call.1} parent=1 // pred_region
      %60 = vsyncadd [#allocation4], 0
      %s62 = sshll.u32 [#allocation5], 4
      %s63 = int_to_ptr.vmem [resolvable:$true] %s62
      %s64 = sshll.u32 %s2, 4
      %s65 = int_to_ptr.hbm [resolvable:$true] %s64
      %67 = dma.vmem_to_hbm [thread:$0]  %s63, 128, %s65, [#allocation4]
    $region17: #{tpu_custom_call.1} parent=1 // pred_fallthru
      _
    // Predicated region
    $region18: #{tpu_custom_call.1} parent=1 // pred_check
      _
    $region19: #{tpu_custom_call.1} parent=1 // pred_check_branch
      %69 = sbr.rel (0) target = $region21
    $region20: #{tpu_custom_call.1} parent=1 // pred_region
      %71 = vsyncadd [#allocation7], 0
      %s73 = sshll.u32 [#allocation6], 4
      %s74 = int_to_ptr.vmem [resolvable:$true] %s73
      %s75 = sshll.u32 %s3, 4
      %s76 = int_to_ptr.hbm [resolvable:$true] %s75
      %78 = dma.vmem_to_hbm [thread:$0]  %s74, 32, %s76, [#allocation7]
    $region21: #{tpu_custom_call.1} parent=1 // pred_fallthru
      _
    // Predicated region
    $region22: #{tpu_custom_call.1} parent=1 // pred_check
      _
    $region23: #{tpu_custom_call.1} parent=1 // pred_check_branch
      %80 = sbr.rel (0) target = $region25
    $region24: #{tpu_custom_call.1} parent=1 // pred_region
      %82 = dma.done [#allocation4], 128
    $region25: #{tpu_custom_call.1} parent=1 // pred_fallthru
      _
    // Predicated region
    $region26: #{tpu_custom_call.1} parent=1 // pred_check
      _
    $region27: #{tpu_custom_call.1} parent=1 // pred_check_branch
      %84 = sbr.rel (0) target = $region29
    $region28: #{tpu_custom_call.1} parent=1 // pred_region
      %86 = dma.done [#allocation7], 32
    $region29: #{tpu_custom_call.1} parent=1 // pred_fallthru
      _
    %87 = vsyncpa [#allocation3], 1
    %88 = vsyncpa [#allocation4], 1
    %89 = vsyncpa [#allocation7], 1

</llo_original>
